<compile_context>
chip_gen: v7x
topology: tpu7x:2x2x1
jax: 0.10.0
libtpu: 0.0.40
codegen_flags: <defaults>
</compile_context>

<pallas_src>
import functools

import jax
import jax.numpy as jnp
from jax.experimental import pallas as pl
from jax.experimental.pallas import tpu as pltpu

_LANE = 128
# ~8 MiB per block: long contiguous DMA bursts, per-step overhead < ~3% even at
# v7x HBM bandwidth, while 2x(in+out) double buffers stay at 32 MiB.
_TARGET_BLOCK_BYTES = 8 * 1024 * 1024
_VMEM_LIMIT_BYTES = 48 * 1024 * 1024   # safe on v7x (64 MiB phys) and v5e/v6e (128 MiB)
_MIN_SPLIT_BYTES = 1 * 1024 * 1024     # above this, force >=2 grid steps (megacore)


def _leaky_relu_kernel(x_ref, o_ref, *, negative_slope):
    x = x_ref[...]
    # Exactly the reference forward: torch.max(x, negative_slope * x)
    o_ref[...] = jnp.maximum(x, negative_slope * x)


def _sublane_multiple(dtype) -> int:
    # Sub-32-bit dtypes pack along sublanes: 8 rows (4B), 16 (2B), 32 (1B).
    return {4: 8, 2: 16, 1: 32}.get(jnp.dtype(dtype).itemsize, 8)


def _leaky_relu_aligned(flat: jax.Array, negative_slope: float, donate: bool) -> jax.Array:
    """Run the Pallas kernel on a 1-D array whose length is a multiple of 128."""
    n = flat.shape[0]
    dtype = flat.dtype
    itemsize = jnp.dtype(dtype).itemsize
    sub = _sublane_multiple(dtype)

    # Widest lane-dense last dim (multiple of 128) that divides n -> pure reshape.
    width = next(c for c in (8192, 4096, 2048, 1024, 512, 256, _LANE) if n % c == 0)
    rows = n // width
    x2d = flat.reshape(rows, width)

    # Rows per block for ~_TARGET_BLOCK_BYTES ...
    tile_rows = max(1, _TARGET_BLOCK_BYTES // (width * itemsize))
    # ... but guarantee a multi-step grid for anything non-tiny so both v7x
    # TensorCores (and their DMA engines) get work.
    total_bytes = n * itemsize
    if total_bytes > _MIN_SPLIT_BYTES:
        min_steps = 4 if total_bytes >= 4 * _MIN_SPLIT_BYTES else 2
        tile_rows = min(tile_rows, pl.cdiv(rows, min_steps))
    # Round to a sublane multiple (required when the block doesn't cover full rows).
    tile_rows = max(sub, (tile_rows // sub) * sub)
    if tile_rows >= rows:
        tile_rows = rows  # single full-dim block (legal regardless of alignment)
    grid = (pl.cdiv(rows, tile_rows),)  # ragged last row-block is masked by Pallas

    kernel = functools.partial(_leaky_relu_kernel, negative_slope=negative_slope)

    out2d = pl.pallas_call(
        kernel,
        out_shape=jax.ShapeDtypeStruct((rows, width), dtype),
        grid_spec=pltpu.PrefetchScalarGridSpec(
            num_scalar_prefetch=0,
            grid=grid,
            in_specs=[pl.BlockSpec((tile_rows, width), lambda i: (i, 0))],
            out_specs=pl.BlockSpec((tile_rows, width), lambda i: (i, 0)),
        ),
        compiler_params=pltpu.CompilerParams(
            dimension_semantics=("parallel",),
            vmem_limit_bytes=_VMEM_LIMIT_BYTES,
        ),
        cost_estimate=pl.CostEstimate(
            flops=2 * n, transcendentals=0, bytes_accessed=2 * n * itemsize
        ),
        input_output_aliases=({0: 0} if donate else {}),
    )(x2d)
    return out2d.reshape(-1)


def leaky_relu(
    x: jax.Array, negative_slope: float = 0.01, *, donate_input: bool = False
) -> jax.Array:
    """Elementwise LeakyReLU forward: max(x, negative_slope * x).

    Floating-point input of any shape. `donate_input=True` aliases the kernel
    output onto the input buffer (use when the input can be donated, e.g. under
    jit); leave False for eager use to avoid a defensive copy.
    """
    if not jnp.issubdtype(x.dtype, jnp.floating):
        raise TypeError(f"leaky_relu kernel expects a floating dtype, got {x.dtype}")
    orig_shape = x.shape
    n = x.size
    if n == 0:
        return x

    flat = jnp.ravel(x)  # contiguous reshape; no data movement
    rem = n % _LANE

    if rem == 0:
        out_flat = _leaky_relu_aligned(flat, negative_slope, donate_input)
    else:
        n_main = n - rem
        if n_main == 0:
            # Tiny (<128 elements): not worth a kernel launch.
            out_flat = jnp.maximum(flat, negative_slope * flat)
        else:
            # Kernel on the 128-aligned prefix; <128-element tail in plain jnp.
            # (No whole-array jnp.pad / [:n] slice round trips anymore.)
            main = _leaky_relu_aligned(flat[:n_main], negative_slope, False)
            tail = flat[n_main:]
            tail = jnp.maximum(tail, negative_slope * tail)
            out_flat = jnp.concatenate([main, tail])

    return out_flat.reshape(orig_shape)


if __name__ == "__main__":
    key = jax.random.PRNGKey(0)

    # Primary test: NCHW GAN-style activation, batch=2, C=4, H=W=16.
    x = jax.random.normal(key, (2, 4, 16, 16), dtype=jnp.float32)
    y_ref = jnp.maximum(x, 0.01 * x)
    y = jax.block_until_ready(leaky_relu(x, negative_slope=0.01))
    assert y.shape == x.shape and y.dtype == x.dtype
    assert jnp.allclose(y, y_ref, atol=0, rtol=0), "f32 mismatch vs reference"

    # bf16 path (common GAN activation dtype) with DCGAN slope 0.2.
    xb = jax.random.normal(jax.random.PRNGKey(1), (2, 4, 16, 16)).astype(jnp.bfloat16)
    yb_ref = jnp.maximum(xb, jnp.bfloat16(0.2) * xb)
    yb = jax.block_until_ready(leaky_relu(xb, negative_slope=0.2))
    assert yb.dtype == jnp.bfloat16 and jnp.allclose(
        yb.astype(jnp.float32), yb_ref.astype(jnp.float32), atol=0, rtol=0
    ), "bf16 mismatch vs reference"

    # Ragged-size path (n not a multiple of 128): aligned prefix + jnp tail.
    xr = jax.random.normal(jax.random.PRNGKey(2), (3, 5, 7, 11), dtype=jnp.float32)
    yr = jax.block_until_ready(leaky_relu(xr, negative_slope=0.01))
    assert jnp.allclose(yr, jnp.maximum(xr, 0.01 * xr), atol=0, rtol=0), "ragged mismatch"

    # Tiny (<128 element) fallback path.
    xt = jax.random.normal(jax.random.PRNGKey(3), (5, 7), dtype=jnp.float32)
    yt = jax.block_until_ready(leaky_relu(xt, negative_slope=0.01))
    assert jnp.allclose(yt, jnp.maximum(xt, 0.01 * xt), atol=0, rtol=0), "tiny mismatch"

    # In-place-style path (input_output_aliases) on a fresh buffer.
    xd = jax.random.normal(jax.random.PRNGKey(4), (2, 4, 16, 16), dtype=jnp.float32)
    yd_ref = jnp.maximum(xd, 0.01 * xd)
    yd = jax.block_until_ready(leaky_relu(xd, negative_slope=0.01, donate_input=True))
    assert jnp.allclose(yd, yd_ref, atol=0, rtol=0), "aliased-output mismatch"

    print("KERNEL_OK")
</pallas_src>

<mosaic_0001>
module attributes {stable_mosaic.version = 11 : i64} {
  func.func @_leaky_relu_kernel(%arg0: i32, %arg1: memref<1x2048xf32, #tpu.memory_space<vmem>>, %arg2: memref<1x2048xf32, #tpu.memory_space<vmem>>) attributes {dimension_semantics = [#tpu.dimension_semantics<parallel>], iteration_bounds = array<i64: 1>, scalar_prefetch = 0 : i64, scratch_operands = 0 : i64, tpu.core_type = #tpu.core_type<tc>, window_params = [{transform_indices = @transform_0, window_bounds = array<i64: 1, 2048>}, {transform_indices = @transform_1, window_bounds = array<i64: 1, 2048>}]} {
    %c0 = arith.constant 0 : index
    %c0_0 = arith.constant 0 : index
    %0 = vector.load %arg1[%c0, %c0_0] : memref<1x2048xf32, #tpu.memory_space<vmem>>, vector<1x2048xf32>
    %cst = arith.constant 0.00999999977 : f32
    %1 = vector.broadcast %cst : f32 to vector<1x2048xf32>
    %2 = arith.mulf %1, %0 : vector<1x2048xf32>
    %3 = arith.maximumf %0, %2 : vector<1x2048xf32>
    %c0_1 = arith.constant 0 : index
    %c0_2 = arith.constant 0 : index
    %4 = vector.load %arg2[%c0_1, %c0_2] : memref<1x2048xf32, #tpu.memory_space<vmem>>, vector<1x2048xf32>
    tpu.vector_store %arg2[%c0_1, %c0_2], %3 {strides = array<i32>} : memref<1x2048xf32, #tpu.memory_space<vmem>>, vector<1x2048xf32>,
    return
  }
  func.func @transform_0(%arg0: i32) -> (i32, i32) {
    %c0_i32 = arith.constant 0 : i32
    %c0_i32_0 = arith.constant 0 : i32
    return %arg0, %c0_i32 : i32, i32
  }
  func.func @transform_1(%arg0: i32) -> (i32, i32) {
    %c0_i32 = arith.constant 0 : i32
    %c0_i32_0 = arith.constant 0 : i32
    return %arg0, %c0_i32 : i32, i32
  }
}

</mosaic_0001>

<llo_original>
// kernel: tpu_custom_call.1
$region0: #{tpu_custom_call.1}
  #allocation0 [shape = 'u32[]', space=smem, size = 0x4, offset = 0x4, fixed_abs, tag = 'smem constant byte address 0x4 - core index']
  #allocation1 [shape = 'u32[144,128]{1,0:T(1,128)}', space=vmem, size = 0x12000, scoped, tag = 'internal scratch']
  %s0 = inlined_call_operand.hbm [shape: f32[1,2048], index: 0, kind: input, shape index: {}]
  %s1 = inlined_call_operand.hbm [shape: f32[1,2048], index: 1, kind: output, shape index: {}]
  %s2 = sld [smem:[#allocation0]]
  $region18: #{tpu_custom_call.1} parent=0
    _
  %s4 = ssub.s32 1, %s2
  %s5 = scalar_select 0, %s4, %s2
  $region1: #{tpu_custom_call.1} parent=0
    #allocation2 [shape = 'u8[8192]{0}', space=vmem, size = 0x2000, scoped, tag = 'input window, operand 0, single buffered']
    #allocation3 [shape = 's32[1]{0}', space=sflag, size = 0x4, scoped, tag = 'scoped memory for tpu_custom_call.1']
    #allocation4 [shape = 's32[1]{0}', space=sflag, size = 0x4, scoped, tag = 'scoped memory for tpu_custom_call.1']
    #allocation5 [shape = 'u8[8192]{0}', space=vmem, size = 0x2000, scoped, tag = 'output window, operand 0, single buffered']
    %6 = vsyncpa [#allocation3], 0
    %7 = vsyncpa [#allocation4], 0
    // Predicated region
    $region2: #{tpu_custom_call.1} parent=1 // pred_check
      _
    $region3: #{tpu_custom_call.1} parent=1 // pred_check_branch
      %9 = sbr.rel (0) target = $region5
    $region4: #{tpu_custom_call.1} parent=1 // pred_region
      %s11 = ssub.s32 256, 256
      %12 = vsyncadd [#allocation3], %s11
      %s14 = sshll.u32 [#allocation2], 4
      %s15 = int_to_ptr.vmem [resolvable:$true] %s14
      %17 = dma.hbm_to_vmem [thread:$0]  %s0, 256, %s15, [#allocation3]
    $region5: #{tpu_custom_call.1} parent=1 // pred_fallthru
      _
    // Predicated region
    $region6: #{tpu_custom_call.1} parent=1 // pred_check
      _
    $region7: #{tpu_custom_call.1} parent=1 // pred_check_branch
      %19 = sbr.rel (0) target = $region9
    $region8: #{tpu_custom_call.1} parent=1 // pred_region
      %20 = dma.done [#allocation3], 256
    $region9: #{tpu_custom_call.1} parent=1 // pred_fallthru
      _
    %v21 = vld [vmem:[#allocation2] sm:$0xff]
    %v22 = vld [vmem:[#allocation2 + $0x8] sm:$0xff]
    %v23 = vmul.f32 %v21, 0.01
    %v24 = vmul.f32 %v22, 0.01
    %v25 = vmax.f32 %v21, %v23
    %v26 = vmax.f32 %v22, %v24
    %27 = vst [vmem:[#allocation5] sm:$0xff] %v25
    %28 = vst [vmem:[#allocation5 + $0x8] sm:$0xff] %v26
    // Predicated region
    $region10: #{tpu_custom_call.1} parent=1 // pred_check
      _
    $region11: #{tpu_custom_call.1} parent=1 // pred_check_branch
      %30 = sbr.rel (0) target = $region13
    $region12: #{tpu_custom_call.1} parent=1 // pred_region
      %s32 = ssub.s32 256, 256
      %33 = vsyncadd [#allocation4], %s32
      %s35 = sshll.u32 [#allocation5], 4
      %s36 = int_to_ptr.vmem [resolvable:$true] %s35
      %38 = dma.vmem_to_hbm [thread:$0]  %s36, 256, %s1, [#allocation4]
    $region13: #{tpu_custom_call.1} parent=1 // pred_fallthru
      _
    // Predicated region
    $region14: #{tpu_custom_call.1} parent=1 // pred_check
      _
    $region15: #{tpu_custom_call.1} parent=1 // pred_check_branch
      %40 = sbr.rel (0) target = $region17
    $region16: #{tpu_custom_call.1} parent=1 // pred_region
      %41 = dma.done [#allocation4], 256
    $region17: #{tpu_custom_call.1} parent=1 // pred_fallthru
      _
    %42 = vsyncpa [#allocation3], 1
    %43 = vsyncpa [#allocation4], 1

</llo_original>
